<compile_context>
chip_gen: v5e
topology: v5e:2x2
jax: 0.10.0
libtpu: 0.0.40
codegen_flags: <defaults>
</compile_context>

<pallas_src>
import functools

import jax
import jax.numpy as jnp
from jax.experimental import pallas as pl
from jax.experimental.pallas import tpu as pltpu


def _rmsnorm_kernel(x_ref, g_ref, o_ref, *, eps):
    # x_ref: (block_rows, D) in I/O dtype; g_ref: (1, D) float32 (pre-cast).
    x = x_ref[...].astype(jnp.float32)                   # x.float()
    ms = jnp.mean(x * x, axis=-1, keepdims=True)         # mean(x^2, -1)  (XLU)
    normed = x * jax.lax.rsqrt(ms + eps)                 # rsqrt -> EUP slot
    o_ref[...] = (normed * g_ref[...]).astype(o_ref.dtype)  # scale in f32, 1 cast


def _round_up(n, m):
    return ((n + m - 1) // m) * m


def _tpu_layout():
    """Return (vmem_capacity_bytes, tensorcores_sharing_a_parallel_grid_axis)."""
    vmem_cap = 128 * 1024 * 1024
    try:
        vmem_cap = int(pltpu.get_tpu_info().vmem_capacity_bytes)
    except Exception:
        pass
    kind = ""
    try:
        kind = jax.devices()[0].device_kind.lower()
    except Exception:
        pass
    n_tc = 1
    # v7x: 2 TCs/chip, 64 MiB VMEM/TC.  v4/v5p megacore also shard a
    # "parallel" grid axis across 2 TCs.
    if "v7" in kind or vmem_cap <= 64 * 1024 * 1024 or "v4" in kind or "v5p" in kind:
        n_tc = 2
    return vmem_cap, n_tc


def rmsnorm(x, g, eps=1e-6, *, block_rows=None):
    """RMSNorm over the last axis of x, scaled by g (shape (D,))."""
    orig_shape = x.shape
    D = orig_shape[-1]
    x2 = x.reshape(-1, D)
    N = x2.shape[0]
    # Pre-cast the gain once in the wrapper (extra HBM cost is only 4*D bytes);
    # the (1, D) block is resident (constant index_map) in the kernel.
    g2 = g.reshape(1, D).astype(jnp.float32)

    itemsize = jnp.dtype(x.dtype).itemsize
    # Native packed-tile sublane count for the I/O dtype.
    sub = {1: 32, 2: 16}.get(itemsize, 8)

    vmem_cap, n_tc = _tpu_layout()
    is_v7x_like = vmem_cap <= 64 * 1024 * 1024
    # ~72% of physical VMEM, capped at 64 MiB (leave headroom for compiler
    # scratch on v7x; v5e/v6e have 128 MiB physical so 64 MiB is plenty).
    vmem_limit = min(int(vmem_cap * 0.72), 64 * 1024 * 1024)

    if block_rows is None:
        # Per-block VMEM footprint estimate:
        #   2x double-buffered input + 2x double-buffered output (I/O dtype)
        #   + ~3 live f32 temps  => bytes_per_row ~= D * (4*itemsize + 12)
        tile_budget = (24 if is_v7x_like else 44) * 1024 * 1024
        bytes_per_row = D * (4 * itemsize + 3 * 4)
        block_rows = max(sub, tile_budget // max(bytes_per_row, 1))
        # Byte-based floor: keep >= ~2 MiB of HBM traffic (read + write) per
        # block so we stay in the ~85%+ roofline regime even for small D/bf16.
        byte_floor_rows = pl.cdiv(1 << 20, max(D * itemsize, 1))
        block_rows = max(block_rows, byte_floor_rows)
        block_rows = max(sub, (block_rows // sub) * sub)
        # No point tiling beyond the (sublane-aligned) number of rows.
        block_rows = min(block_rows, _round_up(N, sub))

        if n_tc >= 2:
            # Feed both TensorCores: at least 2 steps if that does not drop
            # the block below the byte floor, and keep the step count even.
            half = max(sub, _round_up(pl.cdiv(N, 2), sub))
            if half >= byte_floor_rows and half < block_rows:
                block_rows = half
            steps = pl.cdiv(N, block_rows)
            if steps > 1 and steps % 2 == 1:
                cand = max(sub, _round_up(pl.cdiv(N, steps + 1), sub))
                if pl.cdiv(N, cand) % 2 == 0:
                    block_rows = cand

    grid_steps = pl.cdiv(N, block_rows)
    grid = (grid_steps,)

    cost = pl.CostEstimate(
        flops=4 * N * D,
        transcendentals=N,
        bytes_accessed=2 * N * D * itemsize + D * 4,
    )

    # Deeper pipelining only helps when blocks are small AND there are enough
    # steps; otherwise default double-buffering already covers the DMA.
    block_bytes = block_rows * D * itemsize
    x_spec = pl.BlockSpec((block_rows, D), lambda i: (i, 0))
    if block_bytes < (1 << 20) and grid_steps >= 3:
        try:
            x_spec = pl.BlockSpec(
                (block_rows, D), lambda i: (i, 0), pipeline_mode=pl.Buffered(3)
            )
        except TypeError:
            pass  # older API without pipeline_mode; default buffering is fine

    out = pl.pallas_call(
        functools.partial(_rmsnorm_kernel, eps=eps),
        out_shape=jax.ShapeDtypeStruct((N, D), x.dtype),
        grid_spec=pltpu.PrefetchScalarGridSpec(
            num_scalar_prefetch=0,
            grid=grid,
            in_specs=[
                x_spec,
                pl.BlockSpec((1, D), lambda i: (0, 0)),
            ],
            out_specs=pl.BlockSpec((block_rows, D), lambda i: (i, 0)),
        ),
        compiler_params=pltpu.CompilerParams(
            dimension_semantics=("parallel",),
            vmem_limit_bytes=vmem_limit,
        ),
        cost_estimate=cost,
    )(x2, g2)

    return out.reshape(orig_shape)


def rmsnorm_ref(x, g, eps=1e-6):
    xf = x.astype(jnp.float32)
    normed = xf * jax.lax.rsqrt(jnp.mean(xf * xf, axis=-1, keepdims=True) + eps)
    return (g.astype(jnp.float32) * normed).astype(x.dtype)


if __name__ == "__main__":
    key = jax.random.PRNGKey(0)
    eps = 1e-6

    # Primary test: matches the module's implied (batch, seq, hidden) layout.
    batch, seq, hidden = 2, 8, 32
    x = jax.random.normal(key, (batch, seq, hidden), dtype=jnp.float32)
    g = jnp.ones((hidden,), dtype=jnp.float32)  # nn.Parameter(torch.ones(num_dims))

    out = jax.block_until_ready(rmsnorm(x, g, eps))
    ref = rmsnorm_ref(x, g, eps)
    assert out.shape == x.shape and out.dtype == x.dtype
    assert jnp.allclose(out, ref, atol=1e-5, rtol=1e-5)

    # Secondary test: row count not a multiple of the block -> exercises the
    # masked partial-last-block path (no host-side padding copy involved).
    x2 = jax.random.normal(jax.random.PRNGKey(0), (3, 5, 128), dtype=jnp.float32)
    g2 = jax.random.normal(jax.random.PRNGKey(1), (128,), dtype=jnp.float32)
    out2 = jax.block_until_ready(rmsnorm(x2, g2, eps))
    ref2 = rmsnorm_ref(x2, g2, eps)
    assert out2.shape == x2.shape and out2.dtype == x2.dtype
    assert jnp.allclose(out2, ref2, atol=1e-5, rtol=1e-5)

    # Third test: bf16 I/O exercises the packed-sublane (16-row) alignment and
    # the f32-accumulate / single-output-cast path.
    x3 = jax.random.normal(jax.random.PRNGKey(2), (4, 16, 256), dtype=jnp.bfloat16)
    g3 = jax.random.normal(jax.random.PRNGKey(3), (256,), dtype=jnp.bfloat16)
    out3 = jax.block_until_ready(rmsnorm(x3, g3, eps))
    ref3 = rmsnorm_ref(x3, g3, eps)
    assert out3.shape == x3.shape and out3.dtype == x3.dtype
    assert jnp.allclose(
        out3.astype(jnp.float32), ref3.astype(jnp.float32), atol=2e-2, rtol=2e-2
    )

    print("KERNEL_OK")
</pallas_src>

<mosaic_0001>
module attributes {stable_mosaic.version = 11 : i64} {
  func.func @_rmsnorm_kernel(%arg0: i32, %arg1: memref<16x32xf32, #tpu.memory_space<vmem>>, %arg2: memref<1x32xf32, #tpu.memory_space<vmem>>, %arg3: memref<16x32xf32, #tpu.memory_space<vmem>>) attributes {dimension_semantics = [#tpu.dimension_semantics<parallel>], iteration_bounds = array<i64: 1>, scalar_prefetch = 0 : i64, scratch_operands = 0 : i64, tpu.core_type = #tpu.core_type<tc>, window_params = [{transform_indices = @transform_0, window_bounds = array<i64: 16, 32>}, {pipeline_mode = #tpu.pipeline_mode<synchronous>, transform_indices = @transform_1, window_bounds = array<i64: 1, 32>}, {transform_indices = @transform_2, window_bounds = array<i64: 16, 32>}]} {
    %c0 = arith.constant 0 : index
    %c0_0 = arith.constant 0 : index
    %0 = vector.load %arg1[%c0, %c0_0] : memref<16x32xf32, #tpu.memory_space<vmem>>, vector<16x32xf32>
    %1 = arith.mulf %0, %0 : vector<16x32xf32>
    %cst = arith.constant dense<0.000000e+00> : vector<16xf32>
    %2 = vector.multi_reduction <add>, %1, %cst [1] : vector<16x32xf32> to vector<16xf32>
    %3 = vector.shape_cast %2 : vector<16xf32> to vector<16x1xf32>
    %cst_1 = arith.constant 3.200000e+01 : f32
    %4 = vector.broadcast %cst_1 : f32 to vector<16x1xf32>
    %5 = arith.divf %3, %4 : vector<16x1xf32>
    %cst_2 = arith.constant 9.99999997E-7 : f32
    %6 = vector.broadcast %cst_2 : f32 to vector<16x1xf32>
    %7 = arith.addf %5, %6 : vector<16x1xf32>
    %8 = math.rsqrt %7 : vector<16x1xf32>
    %9 = vector.broadcast %8 : vector<16x1xf32> to vector<16x32xf32>
    %10 = arith.mulf %0, %9 : vector<16x32xf32>
    %c0_3 = arith.constant 0 : index
    %c0_4 = arith.constant 0 : index
    %11 = vector.load %arg2[%c0_3, %c0_4] : memref<1x32xf32, #tpu.memory_space<vmem>>, vector<1x32xf32>
    %12 = vector.broadcast %11 : vector<1x32xf32> to vector<16x32xf32>
    %13 = arith.mulf %10, %12 : vector<16x32xf32>
    %c0_5 = arith.constant 0 : index
    %c0_6 = arith.constant 0 : index
    %14 = vector.load %arg3[%c0_5, %c0_6] : memref<16x32xf32, #tpu.memory_space<vmem>>, vector<16x32xf32>
    tpu.vector_store %arg3[%c0_5, %c0_6], %13 {strides = array<i32>} : memref<16x32xf32, #tpu.memory_space<vmem>>, vector<16x32xf32>,
    return
  }
  func.func @transform_0(%arg0: i32) -> (i32, i32) {
    %c0_i32 = arith.constant 0 : i32
    %c0_i32_0 = arith.constant 0 : i32
    return %arg0, %c0_i32 : i32, i32
  }
  func.func @transform_1(%arg0: i32) -> (i32, i32) {
    %c0_i32 = arith.constant 0 : i32
    %c0_i32_0 = arith.constant 0 : i32
    %c0_i32_1 = arith.constant 0 : i32
    return %c0_i32, %c0_i32_0 : i32, i32
  }
  func.func @transform_2(%arg0: i32) -> (i32, i32) {
    %c0_i32 = arith.constant 0 : i32
    %c0_i32_0 = arith.constant 0 : i32
    return %arg0, %c0_i32 : i32, i32
  }
}

</mosaic_0001>

<llo_original>
// kernel: tpu_custom_call.1
$region0: #{tpu_custom_call.1}
  #allocation0 [shape = 'u32[]', space=smem, size = 0x4, offset = 0x4, fixed_abs, tag = 'smem constant byte address 0x4 - core index']
  #allocation1 [shape = 'u32[72,128]{1,0:T(1,128)}', space=vmem, size = 0x9000, scoped, tag = 'internal scratch']
  %s0 = inlined_call_operand.hbm [shape: f32[16,32], index: 0, kind: input, shape index: {}]
  %s1 = inlined_call_operand.hbm [shape: f32[1,32], index: 1, kind: input, shape index: {}]
  %s2 = inlined_call_operand.hbm [shape: f32[16,32], index: 2, kind: output, shape index: {}]
  %s3 = sld [smem:[#allocation0]]
  $region26: #{tpu_custom_call.1} parent=0
    _
  %s5 = ssub.s32 1, %s3
  %s6 = scalar_select 0, %s5, %s3
  $region1: #{tpu_custom_call.1} parent=0
    #allocation2 [shape = 'u8[8192]{0}', space=vmem, size = 0x2000, scoped, tag = 'input window, operand 0, single buffered']
    #allocation3 [shape = 's32[1]{0}', space=sflag, size = 0x4, scoped, tag = 'scoped memory for tpu_custom_call.1']
    #allocation4 [shape = 's32[1]{0}', space=sflag, size = 0x4, scoped, tag = 'scoped memory for tpu_custom_call.1']
    #allocation5 [shape = 'u8[512]{0}', space=vmem, size = 0x400, scoped, tag = 'input window, operand 1, single buffered']
    #allocation6 [shape = 's32[1]{0}', space=sflag, size = 0x4, scoped, tag = 'scoped memory for tpu_custom_call.1']
    #allocation7 [shape = 'u8[8192]{0}', space=vmem, size = 0x2000, scoped, tag = 'output window, operand 0, single buffered']
    %7 = vsyncpa [#allocation3], 0
    %8 = vsyncpa [#allocation6], 0
    %9 = vsyncpa [#allocation4], 0
    // Predicated region
    $region2: #{tpu_custom_call.1} parent=1 // pred_check
      _
    $region3: #{tpu_custom_call.1} parent=1 // pred_check_branch
      %11 = sbr.rel (0) target = $region5
    $region4: #{tpu_custom_call.1} parent=1 // pred_region
      %13 = vsyncadd [#allocation3], 0
      %s14 = sshll.u32 %s0, 4
      %s15 = int_to_ptr.hbm [resolvable:$true] %s14
      %s16 = sshll.u32 [#allocation2], 4
      %s17 = int_to_ptr.vmem [resolvable:$true] %s16
      %22 = dma.hbm_to_vmem [thread:$0]  %s15, 256, %s17, [#allocation3], 128, 128, 8
    $region5: #{tpu_custom_call.1} parent=1 // pred_fallthru
      _
    // Predicated region
    $region6: #{tpu_custom_call.1} parent=1 // pred_check
      _
    $region7: #{tpu_custom_call.1} parent=1 // pred_check_branch
      %24 = sbr.rel (0) target = $region9
    $region8: #{tpu_custom_call.1} parent=1 // pred_region
      %26 = vsyncadd [#allocation6], 0
      %s28 = sshll.u32 %s1, 4
      %s29 = int_to_ptr.hbm [resolvable:$true] %s28
      %s30 = sshll.u32 [#allocation5], 4
      %s31 = int_to_ptr.vmem [resolvable:$true] %s30
      %33 = dma.hbm_to_vmem [thread:$0]  %s29, 16, %s31, [#allocation6]
    $region9: #{tpu_custom_call.1} parent=1 // pred_fallthru
      _
    // Predicated region
    $region10: #{tpu_custom_call.1} parent=1 // pred_check
      _
    $region11: #{tpu_custom_call.1} parent=1 // pred_check_branch
      %35 = sbr.rel (0) target = $region13
    $region12: #{tpu_custom_call.1} parent=1 // pred_region
      %37 = dma.done [#allocation3], 256
    $region13: #{tpu_custom_call.1} parent=1 // pred_fallthru
      _
    // Predicated region
    $region14: #{tpu_custom_call.1} parent=1 // pred_check
      _
    $region15: #{tpu_custom_call.1} parent=1 // pred_check_branch
      %39 = sbr.rel (0) target = $region17
    $region16: #{tpu_custom_call.1} parent=1 // pred_region
      %41 = dma.done [#allocation6], 16
    $region17: #{tpu_custom_call.1} parent=1 // pred_fallthru
      _
    %v42 = vld [vmem:[#allocation2] sm:$0xff]
    %v43 = vld [vmem:[#allocation2 + $0x8] sm:$0xff]
    %v44 = vmul.f32 %v42, %v42
    %v45 = vmul.f32 %v43, %v43
    %vm46 = vcmask 261120
    %v47 = vsel %vm46, %v44, 0.0
    %48 = vadd.xlane.f32.xlu0 %v47
    %v49 = vpop.xlane.xlu0 %48
    %v50 = vsel %vm46, %v45, 0.0
    %51 = vadd.xlane.f32.xlu0 %v50
    %v52 = vpop.xlane.xlu0 %51
    %v53 = vrcp.pop 32.0
    %v54 = vmul.f32 32.0, %v53
    %v55 = vsub.f32 1.0, %v54
    %v56 = vmul.f32 %v53, %v55
    %v57 = vadd.f32 %v53, %v56
    %vm58 = vweird.f32 %v53
    %v59 = vsel %vm58, %v53, %v57
    %v60 = vmul.f32 %v49, %v59
    %v61 = vmul.f32 %v52, %v59
    %v62 = vadd.f32 %v60, 1e-06
    %v63 = vadd.f32 %v61, 1e-06
    %v64 = vrsqrt.pop %v62
    %v65 = vmul.f32 %v64, %v62
    %v66 = vmul.f32 %v65, %v64
    %v67 = vmul.f32 0.5, %v66
    %v68 = vsub.f32 1.5, %v67
    %v69 = vmul.f32 %v64, %v68
    %vm70 = vweird.f32 %v62
    %vm71 = vweird.f32 %v64
    %vm72 = vmor %vm70, %vm71
    %v73 = vsel %vm72, %v64, %v69
    %v74 = vrsqrt.pop %v63
    %v75 = vmul.f32 %v74, %v63
    %v76 = vmul.f32 %v75, %v74
    %v77 = vmul.f32 0.5, %v76
    %v78 = vsub.f32 1.5, %v77
    %v79 = vmul.f32 %v74, %v78
    %vm80 = vweird.f32 %v63
    %vm81 = vweird.f32 %v74
    %vm82 = vmor %vm80, %vm81
    %v83 = vsel %vm82, %v74, %v79
    %v84 = vmul.f32 %v42, %v73
    %v85 = vmul.f32 %v43, %v83
    %v86 = vld [vmem:[#allocation5] sm:$0x1]
    %v88 = vperm.slane %v86, 0
    %v90 = vmul.f32 %v84, %v88
    %v91 = vmul.f32 %v85, %v88
    %92 = vst.msk [vmem:[#allocation7] sm:$0xff] %vm46, %v90
    %93 = vst.msk [vmem:[#allocation7 + $0x8] sm:$0xff] %vm46, %v91
    // Predicated region
    $region18: #{tpu_custom_call.1} parent=1 // pred_check
      _
    $region19: #{tpu_custom_call.1} parent=1 // pred_check_branch
      %95 = sbr.rel (0) target = $region21
    $region20: #{tpu_custom_call.1} parent=1 // pred_region
      %97 = vsyncadd [#allocation4], 0
      %s98 = sshll.u32 [#allocation7], 4
      %s99 = int_to_ptr.vmem [resolvable:$true] %s98
      %s100 = sshll.u32 %s2, 4
      %s101 = int_to_ptr.hbm [resolvable:$true] %s100
      %106 = dma.vmem_to_hbm [thread:$0]  %s99, 256, %s101, [#allocation4], 128, 128, 8
    $region21: #{tpu_custom_call.1} parent=1 // pred_fallthru
      _
    // Predicated region
    $region22: #{tpu_custom_call.1} parent=1 // pred_check
      _
    $region23: #{tpu_custom_call.1} parent=1 // pred_check_branch
      %108 = sbr.rel (0) target = $region25
    $region24: #{tpu_custom_call.1} parent=1 // pred_region
      %110 = dma.done [#allocation4], 256
    $region25: #{tpu_custom_call.1} parent=1 // pred_fallthru
      _
    %111 = vsyncpa [#allocation3], 1
    %112 = vsyncpa [#allocation6], 1
    %113 = vsyncpa [#allocation4], 1

</llo_original>
